<compile_context>
chip_gen: v5e
topology: v5e:2x2
jax: 0.10.0
libtpu: 0.0.40
codegen_flags: <defaults>
</compile_context>

<pallas_src>
import jax
import jax.numpy as jnp
from jax.experimental import pallas as pl
from jax.experimental.pallas import tpu as pltpu


# ----------------------------- Pallas kernel --------------------------------
def conal_kernel(x_ref,                      # (TB, D)            bf16 batch tile
                 wx_ref, bx_ref,             # (D, AUX+H) bf16, (1, AUX+H) f32
                 w2_ref, b2_ref,             # (H, K)    bf16, (1, K)      f32
                 wv2_ref, bv2_ref,           # (AUX, E)  bf16, (1, E)      f32
                 ubig_ref,                   # (E, A*K)  bf16  normalized u, col-replicated
                 wn_ref,                     # (K, 2*A*K) bf16 [lcm_flat | tiled gcm]
                 out_ref):                   # (TB, A*K + K) f32  packed [h_flat | f]
    aux = wv2_ref.shape[0]          # 128  (aux hidden width, vreg aligned)
    ak = ubig_ref.shape[1]          # A*K

    x = x_ref[...]                                                     # (TB, D) bf16

    # ---- fused first-stage matmul: [aux hidden | classifier hidden] ----
    zc = jnp.dot(x, wx_ref[...], preferred_element_type=jnp.float32) + bx_ref[...]
    v1 = zc[:, :aux]                            # aux branch   (TB, 128) f32
    z1 = jnp.maximum(zc[:, aux:], 0.0)          # classifier   (TB, H), ReLU, f32

    # ---- classifier head: Linear -> softmax  ->  f (TB, K) ----
    logits = jnp.dot(z1.astype(jnp.bfloat16), w2_ref[...],
                     preferred_element_type=jnp.float32) + b2_ref[...]
    logits = logits - jnp.max(logits, axis=-1, keepdims=True)
    ez = jnp.exp(logits)
    # exact reciprocal for the softmax denominator (tiny, <=K lanes).
    f = ez * pl.reciprocal(jnp.sum(ez, axis=-1, keepdims=True), approx=False)

    # ---- auxiliary network: w = sigmoid(normalize(v) @ u_big) ----
    v = jnp.dot(v1.astype(jnp.bfloat16), wv2_ref[...],
                preferred_element_type=jnp.float32) + bv2_ref[...]
    # matches torch f.normalize: v / max(||v||, 1e-12)
    v = v * jax.lax.rsqrt(jnp.maximum(jnp.sum(v * v, axis=-1, keepdims=True), 1e-24))
    s = jnp.dot(v.astype(jnp.bfloat16), ubig_ref[...],
                preferred_element_type=jnp.float32)                    # (TB, A*K)
    w = pl.reciprocal(1.0 + jnp.exp(-s), approx=True)                  # sigmoid, lane-dense

    # ---- noise adaptation: one matmul yields local + tiled-global probs ----
    probs = jnp.dot(f.astype(jnp.bfloat16), wn_ref[...],
                    preferred_element_type=jnp.float32)                # (TB, 2*A*K)
    lp = probs[:, :ak]            # local_probs  flattened (TB, A*K)
    gpt = probs[:, ak:]           # global_prob  tiled per annotator (TB, A*K)
    h = w * gpt + (1.0 - w) * lp

    # ---- single packed store: [h_flat | f] ----
    out_ref[...] = jnp.concatenate([h, f], axis=-1)


# ------------------------------ host wrapper ---------------------------------
def conal_forward(x, annotator, p, *, tb=None):
    """CoNAL_net.forward(x, annotator) -> (h, f)."""
    B = x.shape[0]
    # torch.flatten(x, start_dim=1) + bf16 cast in a single producer op so XLA
    # never materializes an extra f32 copy of x in HBM.
    xf = x.reshape(B, -1).astype(jnp.bfloat16)
    D = xf.shape[1]
    A = annotator.shape[0]
    K = p["gcm"].shape[0]
    AUX = p["wv1"].shape[1]       # 128
    H = p["w1"].shape[1]
    E = p["wv2"].shape[1]
    AK = A * K

    # --- batch-independent operand fusion (host side, tiny / reshape-only) ---
    # aux branch first so the in-kernel lane split is vreg aligned (128 | H).
    wx = jnp.concatenate([p["wv1"], p["w1"]], axis=1).astype(jnp.bfloat16)   # (D, 128+H)
    bx = jnp.concatenate([p["bv1"], p["b1"]], axis=1).astype(jnp.float32)    # (1, 128+H)

    # annotator embedding does not depend on the batch: compute + normalize +
    # transpose once, replicating each annotator column K times so that
    # sigmoid(v @ u_big) is directly the flattened (B, A*K) mixing weight.
    u = annotator.astype(jnp.float32) @ p["wu"] + p["bu"]                    # (A, E)
    u = u / jnp.maximum(jnp.linalg.norm(u, axis=1, keepdims=True), 1e-12)
    u_big = jnp.repeat(u, K, axis=0).T.astype(jnp.bfloat16)                  # (E, A*K)

    # noise-adaptation weights: [lcm_flat | gcm tiled A times] -> one matmul.
    lcm_flat = jnp.transpose(p["lcm"], (1, 0, 2)).reshape(K, AK)             # [k, j*K+l] = lcm[j,k,l]
    wn = jnp.concatenate([lcm_flat, jnp.tile(p["gcm"], (1, A))],
                         axis=1).astype(jnp.bfloat16)                        # (K, 2*A*K)

    w2 = p["w2"].astype(jnp.bfloat16)
    b2 = p["b2"].astype(jnp.float32)
    wv2 = p["wv2"].astype(jnp.bfloat16)
    bv2 = p["bv2"].astype(jnp.float32)

    # --- batch tiling ---
    if tb is None:
        if B <= 256:
            tb = B                  # single full tile for small batches
        else:
            # 512-row tiles for HBM-roofline efficiency, but never a single
            # tile for the whole batch: >=2 grid steps feeds both v7x TCs.
            tb = min(512, max(256, 8 * pl.cdiv(pl.cdiv(B, 2), 8)))
    grid = (pl.cdiv(B, tb),)

    batch_map = lambda i: (i, 0)
    fixed_map = lambda i: (0, 0)

    weights = (wx, bx, w2, b2, wv2, bv2, u_big, wn)
    in_specs = [pl.BlockSpec((tb, D), batch_map)] + \
               [pl.BlockSpec(a.shape, fixed_map) for a in weights]

    # Advisory cost estimate so the enclosing jit schedules around the call.
    flops = 2 * B * (D * (AUX + H) + H * K + AUX * E + E * AK + K * 2 * AK)
    transcendentals = B * (K + AK)                       # softmax exp + sigmoid exp
    bytes_accessed = (int(xf.size) * xf.dtype.itemsize
                      + sum(int(a.size) * a.dtype.itemsize for a in weights)
                      + B * (AK + K) * 4)

    hf = pl.pallas_call(
        conal_kernel,
        grid=grid,
        in_specs=in_specs,
        out_specs=pl.BlockSpec((tb, AK + K), batch_map),     # packed [h | f]
        out_shape=jax.ShapeDtypeStruct((B, AK + K), jnp.float32),
        compiler_params=pltpu.CompilerParams(
            dimension_semantics=("parallel",)),
        cost_estimate=pl.CostEstimate(flops=flops,
                                      transcendentals=transcendentals,
                                      bytes_accessed=bytes_accessed),
    )(xf, *weights)

    h = hf[:, :AK].reshape(B, A, K)
    f = hf[:, AK:]
    return h, f


# --------------------------- pure-JAX reference ------------------------------
def conal_reference(x, annotator, p):
    B = x.shape[0]
    xf = x.reshape(B, -1)
    z = jnp.maximum(xf @ p["w1"] + p["b1"], 0.0)
    f = jax.nn.softmax(z @ p["w2"] + p["b2"], axis=-1)
    v = xf @ p["wv1"] + p["bv1"]
    v = v @ p["wv2"] + p["bv2"]
    v = v / jnp.maximum(jnp.linalg.norm(v, axis=1, keepdims=True), 1e-12)
    u = annotator @ p["wu"] + p["bu"]
    u = u / jnp.maximum(jnp.linalg.norm(u, axis=1, keepdims=True), 1e-12)
    w = jax.nn.sigmoid(v @ u.T)
    gp = f @ p["gcm"]
    lp = jnp.einsum('ik,jkl->ijl', f, p["lcm"])
    h = w[:, :, None] * gp[:, None, :] + (1.0 - w[:, :, None]) * lp
    return h, f


# ---------------------------------- main --------------------------------------
if __name__ == "__main__":
    # Small, deterministic shapes.
    B, C, Himg, Wimg = 2, 4, 16, 16
    input_dim = C * Himg * Wimg   # 1024
    n_class = 8
    n_annotator = 5
    annotator_dim = n_annotator    # one-hot annotator ids
    embedding_dim = 16             # w_dim of the auxiliary network
    hidden = 32                    # classifier hidden width

    key = jax.random.PRNGKey(0)
    ks = jax.random.split(key, 10)

    def init(k, shape, scale=0.02):
        return (scale * jax.random.normal(k, shape)).astype(jnp.float32)

    # Biases stored as (1, N) so every ref inside the kernel is 2-D.
    params = {
        # classifier
        "w1": init(ks[0], (input_dim, hidden)),
        "b1": init(ks[1], (1, hidden)),
        "w2": init(ks[2], (hidden, n_class)),
        "b2": init(ks[3], (1, n_class)),
        # auxiliary network
        "wv1": init(ks[4], (input_dim, 128)),
        "bv1": init(ks[5], (1, 128)),
        "wv2": init(ks[6], (128, embedding_dim)),
        "bv2": init(ks[7], (1, embedding_dim)),
        "wu": init(ks[8], (annotator_dim, embedding_dim)),
        "bu": init(ks[9], (1, embedding_dim)),
        # noise adaptation layer (matches torch.eye(n_class) * 2)
        "gcm": (jnp.eye(n_class, dtype=jnp.float32) * 2.0),
        "lcm": jnp.stack([jnp.eye(n_class, dtype=jnp.float32) * 2.0
                          for _ in range(n_annotator)]),
    }

    x = jax.random.normal(jax.random.PRNGKey(42), (B, C, Himg, Wimg), dtype=jnp.float32)
    annotator = jnp.eye(n_annotator, annotator_dim, dtype=jnp.float32)

    fwd = jax.jit(conal_forward)
    h, f = fwd(x, annotator, params)
    h = jax.block_until_ready(h)
    f = jax.block_until_ready(f)

    h_ref, f_ref = conal_reference(x, annotator, params)
    assert h.shape == (B, n_annotator, n_class) and f.shape == (B, n_class)
    # Tolerance accounts for bf16 MXU inputs + EUP approx sigmoid reciprocal.
    assert jnp.allclose(h, h_ref, atol=5e-3, rtol=5e-3)
    assert jnp.allclose(f, f_ref, atol=5e-3, rtol=5e-3)

    print("KERNEL_OK")
</pallas_src>

<mosaic_0001>
module attributes {stable_mosaic.version = 11 : i64} {
  func.func @conal_kernel(%arg0: i32, %arg1: memref<2x1024xbf16, #tpu.memory_space<vmem>>, %arg2: memref<1024x160xbf16, #tpu.memory_space<vmem>>, %arg3: memref<1x160xf32, #tpu.memory_space<vmem>>, %arg4: memref<32x8xbf16, #tpu.memory_space<vmem>>, %arg5: memref<1x8xf32, #tpu.memory_space<vmem>>, %arg6: memref<128x16xbf16, #tpu.memory_space<vmem>>, %arg7: memref<1x16xf32, #tpu.memory_space<vmem>>, %arg8: memref<16x40xbf16, #tpu.memory_space<vmem>>, %arg9: memref<8x80xbf16, #tpu.memory_space<vmem>>, %arg10: memref<2x48xf32, #tpu.memory_space<vmem>>) attributes {dimension_semantics = [#tpu.dimension_semantics<parallel>], iteration_bounds = array<i64: 1>, scalar_prefetch = 0 : i64, scratch_operands = 0 : i64, tpu.core_type = #tpu.core_type<tc>, window_params = [{transform_indices = @transform_0, window_bounds = array<i64: 2, 1024>}, {pipeline_mode = #tpu.pipeline_mode<synchronous>, transform_indices = @transform_1, window_bounds = array<i64: 1024, 160>}, {pipeline_mode = #tpu.pipeline_mode<synchronous>, transform_indices = @transform_2, window_bounds = array<i64: 1, 160>}, {pipeline_mode = #tpu.pipeline_mode<synchronous>, transform_indices = @transform_3, window_bounds = array<i64: 32, 8>}, {pipeline_mode = #tpu.pipeline_mode<synchronous>, transform_indices = @transform_4, window_bounds = array<i64: 1, 8>}, {pipeline_mode = #tpu.pipeline_mode<synchronous>, transform_indices = @transform_5, window_bounds = array<i64: 128, 16>}, {pipeline_mode = #tpu.pipeline_mode<synchronous>, transform_indices = @transform_6, window_bounds = array<i64: 1, 16>}, {pipeline_mode = #tpu.pipeline_mode<synchronous>, transform_indices = @transform_7, window_bounds = array<i64: 16, 40>}, {pipeline_mode = #tpu.pipeline_mode<synchronous>, transform_indices = @transform_8, window_bounds = array<i64: 8, 80>}, {transform_indices = @transform_9, window_bounds = array<i64: 2, 48>}]} {
    %c0 = arith.constant 0 : index
    %c0_0 = arith.constant 0 : index
    %0 = vector.load %arg1[%c0, %c0_0] : memref<2x1024xbf16, #tpu.memory_space<vmem>>, vector<2x1024xbf16>
    %c0_1 = arith.constant 0 : index
    %c0_2 = arith.constant 0 : index
    %1 = vector.load %arg2[%c0_1, %c0_2] : memref<1024x160xbf16, #tpu.memory_space<vmem>>, vector<1024x160xbf16>
    %cst = arith.constant dense<0.000000e+00> : vector<2x160xf32>
    %2 = tpu.matmul %0, %1, %cst {dimension_numbers = #tpu.dot_dimension_numbers<[1], [0], [0], [1], [0, 0, 1, 1], [], []>} : vector<2x1024xbf16>, vector<1024x160xbf16>, vector<2x160xf32> -> vector<2x160xf32>
    %c0_3 = arith.constant 0 : index
    %c0_4 = arith.constant 0 : index
    %3 = vector.load %arg3[%c0_3, %c0_4] : memref<1x160xf32, #tpu.memory_space<vmem>>, vector<1x160xf32>
    %4 = vector.broadcast %3 : vector<1x160xf32> to vector<2x160xf32>
    %5 = arith.addf %2, %4 : vector<2x160xf32>
    %6 = vector.extract_strided_slice %5 {offsets = [0, 0], sizes = [2, 128], strides = [1, 1]} : vector<2x160xf32> to vector<2x128xf32>
    %7 = vector.extract_strided_slice %5 {offsets = [0, 128], sizes = [2, 32], strides = [1, 1]} : vector<2x160xf32> to vector<2x32xf32>
    %cst_5 = arith.constant 0.000000e+00 : f32
    %8 = vector.broadcast %cst_5 : f32 to vector<2x32xf32>
    %9 = arith.maximumf %7, %8 : vector<2x32xf32>
    %10 = arith.truncf %9 : vector<2x32xf32> to vector<2x32xbf16>
    %c0_6 = arith.constant 0 : index
    %c0_7 = arith.constant 0 : index
    %11 = vector.load %arg4[%c0_6, %c0_7] : memref<32x8xbf16, #tpu.memory_space<vmem>>, vector<32x8xbf16>
    %cst_8 = arith.constant dense<0.000000e+00> : vector<2x8xf32>
    %12 = tpu.matmul %10, %11, %cst_8 {dimension_numbers = #tpu.dot_dimension_numbers<[1], [0], [0], [1], [0, 0, 1, 1], [], []>} : vector<2x32xbf16>, vector<32x8xbf16>, vector<2x8xf32> -> vector<2x8xf32>
    %c0_9 = arith.constant 0 : index
    %c0_10 = arith.constant 0 : index
    %13 = vector.load %arg5[%c0_9, %c0_10] : memref<1x8xf32, #tpu.memory_space<vmem>>, vector<1x8xf32>
    %14 = vector.broadcast %13 : vector<1x8xf32> to vector<2x8xf32>
    %15 = arith.addf %12, %14 : vector<2x8xf32>
    %cst_11 = arith.constant dense<0xFF800000> : vector<2xf32>
    %16 = vector.multi_reduction <maximumf>, %15, %cst_11 [1] : vector<2x8xf32> to vector<2xf32>
    %17 = vector.shape_cast %16 : vector<2xf32> to vector<2x1xf32>
    %18 = vector.broadcast %17 : vector<2x1xf32> to vector<2x8xf32>
    %19 = arith.subf %15, %18 : vector<2x8xf32>
    %20 = math.exp %19 : vector<2x8xf32>
    %cst_12 = arith.constant dense<0.000000e+00> : vector<2xf32>
    %21 = vector.multi_reduction <add>, %20, %cst_12 [1] : vector<2x8xf32> to vector<2xf32>
    %22 = vector.shape_cast %21 : vector<2xf32> to vector<2x1xf32>
    %23 = tpu.reciprocal %22 : vector<2x1xf32> -> vector<2x1xf32>
    %24 = vector.broadcast %23 : vector<2x1xf32> to vector<2x8xf32>
    %25 = arith.mulf %20, %24 : vector<2x8xf32>
    %26 = arith.truncf %6 : vector<2x128xf32> to vector<2x128xbf16>
    %c0_13 = arith.constant 0 : index
    %c0_14 = arith.constant 0 : index
    %27 = vector.load %arg6[%c0_13, %c0_14] : memref<128x16xbf16, #tpu.memory_space<vmem>>, vector<128x16xbf16>
    %cst_15 = arith.constant dense<0.000000e+00> : vector<2x16xf32>
    %28 = tpu.matmul %26, %27, %cst_15 {dimension_numbers = #tpu.dot_dimension_numbers<[1], [0], [0], [1], [0, 0, 1, 1], [], []>} : vector<2x128xbf16>, vector<128x16xbf16>, vector<2x16xf32> -> vector<2x16xf32>
    %c0_16 = arith.constant 0 : index
    %c0_17 = arith.constant 0 : index
    %29 = vector.load %arg7[%c0_16, %c0_17] : memref<1x16xf32, #tpu.memory_space<vmem>>, vector<1x16xf32>
    %30 = vector.broadcast %29 : vector<1x16xf32> to vector<2x16xf32>
    %31 = arith.addf %28, %30 : vector<2x16xf32>
    %32 = arith.mulf %31, %31 : vector<2x16xf32>
    %cst_18 = arith.constant dense<0.000000e+00> : vector<2xf32>
    %33 = vector.multi_reduction <add>, %32, %cst_18 [1] : vector<2x16xf32> to vector<2xf32>
    %34 = vector.shape_cast %33 : vector<2xf32> to vector<2x1xf32>
    %cst_19 = arith.constant 1.000000e-24 : f32
    %35 = vector.broadcast %cst_19 : f32 to vector<2x1xf32>
    %36 = arith.maximumf %34, %35 : vector<2x1xf32>
    %37 = math.rsqrt %36 : vector<2x1xf32>
    %38 = vector.broadcast %37 : vector<2x1xf32> to vector<2x16xf32>
    %39 = arith.mulf %31, %38 : vector<2x16xf32>
    %40 = arith.truncf %39 : vector<2x16xf32> to vector<2x16xbf16>
    %c0_20 = arith.constant 0 : index
    %c0_21 = arith.constant 0 : index
    %41 = vector.load %arg8[%c0_20, %c0_21] : memref<16x40xbf16, #tpu.memory_space<vmem>>, vector<16x40xbf16>
    %cst_22 = arith.constant dense<0.000000e+00> : vector<2x40xf32>
    %42 = tpu.matmul %40, %41, %cst_22 {dimension_numbers = #tpu.dot_dimension_numbers<[1], [0], [0], [1], [0, 0, 1, 1], [], []>} : vector<2x16xbf16>, vector<16x40xbf16>, vector<2x40xf32> -> vector<2x40xf32>
    %cst_23 = arith.constant 0.000000e+00 : f32
    %43 = vector.broadcast %cst_23 : f32 to vector<2x40xf32>
    %44 = arith.subf %43, %42 : vector<2x40xf32>
    %45 = math.exp %44 : vector<2x40xf32>
    %cst_24 = arith.constant 1.000000e+00 : f32
    %46 = vector.broadcast %cst_24 : f32 to vector<2x40xf32>
    %47 = arith.addf %46, %45 : vector<2x40xf32>
    %48 = tpu.reciprocal %47 {approx = true} : vector<2x40xf32> -> vector<2x40xf32>
    %49 = arith.truncf %25 : vector<2x8xf32> to vector<2x8xbf16>
    %c0_25 = arith.constant 0 : index
    %c0_26 = arith.constant 0 : index
    %50 = vector.load %arg9[%c0_25, %c0_26] : memref<8x80xbf16, #tpu.memory_space<vmem>>, vector<8x80xbf16>
    %cst_27 = arith.constant dense<0.000000e+00> : vector<2x80xf32>
    %51 = tpu.matmul %49, %50, %cst_27 {dimension_numbers = #tpu.dot_dimension_numbers<[1], [0], [0], [1], [0, 0, 1, 1], [], []>} : vector<2x8xbf16>, vector<8x80xbf16>, vector<2x80xf32> -> vector<2x80xf32>
    %52 = vector.extract_strided_slice %51 {offsets = [0, 0], sizes = [2, 40], strides = [1, 1]} : vector<2x80xf32> to vector<2x40xf32>
    %53 = vector.extract_strided_slice %51 {offsets = [0, 40], sizes = [2, 40], strides = [1, 1]} : vector<2x80xf32> to vector<2x40xf32>
    %54 = arith.mulf %48, %53 : vector<2x40xf32>
    %cst_28 = arith.constant 1.000000e+00 : f32
    %55 = vector.broadcast %cst_28 : f32 to vector<2x40xf32>
    %56 = arith.subf %55, %48 : vector<2x40xf32>
    %57 = arith.mulf %56, %52 : vector<2x40xf32>
    %58 = arith.addf %54, %57 : vector<2x40xf32>
    %59 = tpu.concatenate %58, %25 in 1 : vector<2x40xf32>, vector<2x8xf32> -> vector<2x48xf32>
    %c0_29 = arith.constant 0 : index
    %c0_30 = arith.constant 0 : index
    %60 = vector.load %arg10[%c0_29, %c0_30] : memref<2x48xf32, #tpu.memory_space<vmem>>, vector<2x48xf32>
    tpu.vector_store %arg10[%c0_29, %c0_30], %59 {strides = array<i32>} : memref<2x48xf32, #tpu.memory_space<vmem>>, vector<2x48xf32>,
    return
  }
  func.func @transform_0(%arg0: i32) -> (i32, i32) {
    %c0_i32 = arith.constant 0 : i32
    %c0_i32_0 = arith.constant 0 : i32
    return %arg0, %c0_i32 : i32, i32
  }
  func.func @transform_1(%arg0: i32) -> (i32, i32) {
    %c0_i32 = arith.constant 0 : i32
    %c0_i32_0 = arith.constant 0 : i32
    %c0_i32_1 = arith.constant 0 : i32
    return %c0_i32, %c0_i32_0 : i32, i32
  }
  func.func @transform_2(%arg0: i32) -> (i32, i32) {
    %c0_i32 = arith.constant 0 : i32
    %c0_i32_0 = arith.constant 0 : i32
    %c0_i32_1 = arith.constant 0 : i32
    return %c0_i32, %c0_i32_0 : i32, i32
  }
  func.func @transform_3(%arg0: i32) -> (i32, i32) {
    %c0_i32 = arith.constant 0 : i32
    %c0_i32_0 = arith.constant 0 : i32
    %c0_i32_1 = arith.constant 0 : i32
    return %c0_i32, %c0_i32_0 : i32, i32
  }
  func.func @transform_4(%arg0: i32) -> (i32, i32) {
    %c0_i32 = arith.constant 0 : i32
    %c0_i32_0 = arith.constant 0 : i32
    %c0_i32_1 = arith.constant 0 : i32
    return %c0_i32, %c0_i32_0 : i32, i32
  }
  func.func @transform_5(%arg0: i32) -> (i32, i32) {
    %c0_i32 = arith.constant 0 : i32
    %c0_i32_0 = arith.constant 0 : i32
    %c0_i32_1 = arith.constant 0 : i32
    return %c0_i32, %c0_i32_0 : i32, i32
  }
  func.func @transform_6(%arg0: i32) -> (i32, i32) {
    %c0_i32 = arith.constant 0 : i32
    %c0_i32_0 = arith.constant 0 : i32
    %c0_i32_1 = arith.constant 0 : i32
    return %c0_i32, %c0_i32_0 : i32, i32
  }
  func.func @transform_7(%arg0: i32) -> (i32, i32) {
    %c0_i32 = arith.constant 0 : i32
    %c0_i32_0 = arith.constant 0 : i32
    %c0_i32_1 = arith.constant 0 : i32
    return %c0_i32, %c0_i32_0 : i32, i32
  }
  func.func @transform_8(%arg0: i32) -> (i32, i32) {
    %c0_i32 = arith.constant 0 : i32
    %c0_i32_0 = arith.constant 0 : i32
    %c0_i32_1 = arith.constant 0 : i32
    return %c0_i32, %c0_i32_0 : i32, i32
  }
  func.func @transform_9(%arg0: i32) -> (i32, i32) {
    %c0_i32 = arith.constant 0 : i32
    %c0_i32_0 = arith.constant 0 : i32
    return %arg0, %c0_i32 : i32, i32
  }
}

</mosaic_0001>

<llo_original>
// kernel: conal_forward.1
$region0: #{conal_forward.1}
  #allocation0 [shape = 'u32[]', space=smem, size = 0x4, offset = 0x4, fixed_abs, tag = 'smem constant byte address 0x4 - core index']
  #allocation1 [shape = 'u32[72,128]{1,0:T(1,128)}', space=vmem, size = 0x9000, scoped, tag = 'internal scratch']
  %s0 = inlined_call_operand.vmem [shape: bf16[2,1024], index: 0, kind: input, shape index: {}]
  %s1 = inlined_call_operand.vmem [shape: bf16[1024,160], index: 1, kind: input, shape index: {}]
  %s2 = inlined_call_operand.vmem [shape: f32[1,160], index: 2, kind: input, shape index: {}]
  %s3 = inlined_call_operand.vmem [shape: bf16[32,8], index: 3, kind: input, shape index: {}]
  %s4 = inlined_call_operand.vmem [shape: f32[1,8], index: 4, kind: input, shape index: {}]
  %s5 = inlined_call_operand.vmem [shape: bf16[128,16], index: 5, kind: input, shape index: {}]
  %s6 = inlined_call_operand.vmem [shape: f32[1,16], index: 6, kind: input, shape index: {}]
  %s7 = inlined_call_operand.vmem [shape: bf16[16,40], index: 7, kind: input, shape index: {}]
  %s8 = inlined_call_operand.vmem [shape: bf16[8,80], index: 8, kind: input, shape index: {}]
  %s9 = inlined_call_operand.vmem [shape: f32[2,48], index: 9, kind: output, shape index: {}]
  %s10 = sld [smem:[#allocation0]]
  $region46: #{conal_forward.1} parent=0
    _
  %s12 = ssub.s32 1, %s10
  %s13 = scalar_select 0, %s12, %s10
  // Predicated region
  $region2: #{conal_forward.1} parent=0 // pred_check
    _
  $region3: #{conal_forward.1} parent=0 // pred_check_branch
    %15 = sbr.rel (0) target = $region5
  $region4: #{conal_forward.1} parent=0 // pred_region
    _
  $region5: #{conal_forward.1} parent=0 // pred_fallthru
    _
  // Predicated region
  $region6: #{conal_forward.1} parent=0 // pred_check
    _
  $region7: #{conal_forward.1} parent=0 // pred_check_branch
    %17 = sbr.rel (0) target = $region9
  $region8: #{conal_forward.1} parent=0 // pred_region
    _
  $region9: #{conal_forward.1} parent=0 // pred_fallthru
    _
  // Predicated region
  $region10: #{conal_forward.1} parent=0 // pred_check
    _
  $region11: #{conal_forward.1} parent=0 // pred_check_branch
    %19 = sbr.rel (0) target = $region13
  $region12: #{conal_forward.1} parent=0 // pred_region
    _
  $region13: #{conal_forward.1} parent=0 // pred_fallthru
    _
  // Predicated region
  $region14: #{conal_forward.1} parent=0 // pred_check
    _
  $region15: #{conal_forward.1} parent=0 // pred_check_branch
    %21 = sbr.rel (0) target = $region17
  $region16: #{conal_forward.1} parent=0 // pred_region
    _
  $region17: #{conal_forward.1} parent=0 // pred_fallthru
    _
  // Predicated region
  $region18: #{conal_forward.1} parent=0 // pred_check
    _
  $region19: #{conal_forward.1} parent=0 // pred_check_branch
    %23 = sbr.rel (0) target = $region21
  $region20: #{conal_forward.1} parent=0 // pred_region
    _
  $region21: #{conal_forward.1} parent=0 // pred_fallthru
    _
  // Predicated region
  $region22: #{conal_forward.1} parent=0 // pred_check
    _
  $region23: #{conal_forward.1} parent=0 // pred_check_branch
    %25 = sbr.rel (0) target = $region25
  $region24: #{conal_forward.1} parent=0 // pred_region
    _
  $region25: #{conal_forward.1} parent=0 // pred_fallthru
    _
  // Predicated region
  $region26: #{conal_forward.1} parent=0 // pred_check
    _
  $region27: #{conal_forward.1} parent=0 // pred_check_branch
    %27 = sbr.rel (0) target = $region29
  $region28: #{conal_forward.1} parent=0 // pred_region
    _
  $region29: #{conal_forward.1} parent=0 // pred_fallthru
    _
  // Predicated region
  $region30: #{conal_forward.1} parent=0 // pred_check
    _
  $region31: #{conal_forward.1} parent=0 // pred_check_branch
    %29 = sbr.rel (0) target = $region33
  $region32: #{conal_forward.1} parent=0 // pred_region
    _
  $region33: #{conal_forward.1} parent=0 // pred_fallthru
    _
  // Predicated region
  $region34: #{conal_forward.1} parent=0 // pred_check
    _
  $region35: #{conal_forward.1} parent=0 // pred_check_branch
    %31 = sbr.rel (0) target = $region37
  $region36: #{conal_forward.1} parent=0 // pred_region
    _
  $region37: #{conal_forward.1} parent=0 // pred_fallthru
    _
  %v33 = vld [vmem:[%s0] sm:$0xff]
  %v34 = vld [vmem:[%s1] sm:$0xff]
  %v35 = vld [vmem:[%s1 + $0x8] sm:$0xff]
  %v36 = vld [vmem:[%s1 + $0x10] sm:$0xff]
  %v37 = vld [vmem:[%s1 + $0x18] sm:$0xff]
  %v38 = vld [vmem:[%s1 + $0x20] sm:$0xff]
  %v39 = vld [vmem:[%s1 + $0x28] sm:$0xff]
  %v40 = vld [vmem:[%s1 + $0x30] sm:$0xff]
  %v41 = vld [vmem:[%s1 + $0x38] sm:$0xff]
  %v42 = vld [vmem:[%s1 + $0x40] sm:$0xff]
  %v43 = vld [vmem:[%s1 + $0x48] sm:$0xff]
  %v44 = vld [vmem:[%s1 + $0x50] sm:$0xff]
  %v45 = vld [vmem:[%s1 + $0x58] sm:$0xff]
  %v46 = vld [vmem:[%s1 + $0x60] sm:$0xff]
  %v47 = vld [vmem:[%s1 + $0x68] sm:$0xff]
  %v48 = vld [vmem:[%s1 + $0x70] sm:$0xff]
  %v49 = vld [vmem:[%s1 + $0x78] sm:$0xff]
  %v50 = vld [vmem:[%s1 + $0x80] sm:$0xff]
  %v51 = vld [vmem:[%s1 + $0x88] sm:$0xff]
  %v52 = vld [vmem:[%s1 + $0x90] sm:$0xff]
  %v53 = vld [vmem:[%s1 + $0x98] sm:$0xff]
  %v54 = vld [vmem:[%s1 + $0xa0] sm:$0xff]
  %v55 = vld [vmem:[%s1 + $0xa8] sm:$0xff]
  %v56 = vld [vmem:[%s1 + $0xb0] sm:$0xff]
  %v57 = vld [vmem:[%s1 + $0xb8] sm:$0xff]
  %v58 = vld [vmem:[%s1 + $0xc0] sm:$0xff]
  %v59 = vld [vmem:[%s1 + $0xc8] sm:$0xff]
  %v60 = vld [vmem:[%s1 + $0xd0] sm:$0xff]
  %v61 = vld [vmem:[%s1 + $0xd8] sm:$0xff]
  %v62 = vld [vmem:[%s1 + $0xe0] sm:$0xff]
  %v63 = vld [vmem:[%s1 + $0xe8] sm:$0xff]
  %v64 = vld [vmem:[%s1 + $0xf0] sm:$0xff]
  %v65 = vld [vmem:[%s1 + $0xf8] sm:$0xff]
  %v66 = vld [vmem:[%s1 + $0x100] sm:$0xff]
  %v67 = vld [vmem:[%s1 + $0x108] sm:$0xff]
  %v68 = vld [vmem:[%s1 + $0x110] sm:$0xff]
  %v69 = vld [vmem:[%s1 + $0x118] sm:$0xff]
  %v70 = vld [vmem:[%s1 + $0x120] sm:$0xff]
  %v71 = vld [vmem:[%s1 + $0x128] sm:$0xff]
  %v72 = vld [vmem:[%s1 + $0x130] sm:$0xff]
  %v73 = vld [vmem:[%s1 + $0x138] sm:$0xff]
  %v74 = vld [vmem:[%s1 + $0x140] sm:$0xff]
  %v75 = vld [vmem:[%s1 + $0x148] sm:$0xff]
  %v76 = vld [vmem:[%s1 + $0x150] sm:$0xff]
  %v77 = vld [vmem:[%s1 + $0x158] sm:$0xff]
  %v78 = vld [vmem:[%s1 + $0x160] sm:$0xff]
  %v79 = vld [vmem:[%s1 + $0x168] sm:$0xff]
  %v80 = vld [vmem:[%s1 + $0x170] sm:$0xff]
  %v81 = vld [vmem:[%s1 + $0x178] sm:$0xff]
  %v82 = vld [vmem:[%s1 + $0x180] sm:$0xff]
  %v83 = vld [vmem:[%s1 + $0x188] sm:$0xff]
  %v84 = vld [vmem:[%s1 + $0x190] sm:$0xff]
  %v85 = vld [vmem:[%s1 + $0x198] sm:$0xff]
  %v86 = vld [vmem:[%s1 + $0x1a0] sm:$0xff]
  %v87 = vld [vmem:[%s1 + $0x1a8] sm:$0xff]
  %v88 = vld [vmem:[%s1 + $0x1b0] sm:$0xff]
  %v89 = vld [vmem:[%s1 + $0x1b8] sm:$0xff]
  %v90 = vld [vmem:[%s1 + $0x1c0] sm:$0xff]
  %v91 = vld [vmem:[%s1 + $0x1c8] sm:$0xff]
  %v92 = vld [vmem:[%s1 + $0x1d0] sm:$0xff]
  %v93 = vld [vmem:[%s1 + $0x1d8] sm:$0xff]
  %v94 = vld [vmem:[%s1 + $0x1e0] sm:$0xff]
  %v95 = vld [vmem:[%s1 + $0x1e8] sm:$0xff]
  %v96 = vld [vmem:[%s1 + $0x1f0] sm:$0xff]
  %v97 = vld [vmem:[%s1 + $0x1f8] sm:$0xff]
  %v98 = vld [vmem:[%s1 + $0x200] sm:$0xff]
  %v99 = vld [vmem:[%s1 + $0x208] sm:$0xff]
  %v100 = vld [vmem:[%s1 + $0x210] sm:$0xff]
  %v101 = vld [vmem:[%s1 + $0x218] sm:$0xff]
  %v102 = vld [vmem:[%s1 + $0x220] sm:$0xff]
  %v103 = vld [vmem:[%s1 + $0x228] sm:$0xff]
  %v104 = vld [vmem:[%s1 + $0x230] sm:$0xff]
  %v105 = vld [vmem:[%s1 + $0x238] sm:$0xff]
  %v106 = vld [vmem:[%s1 + $0x240] sm:$0xff]
  %v107 = vld [vmem:[%s1 + $0x248] sm:$0xff]
  %v108 = vld [vmem:[%s1 + $0x250] sm:$0xff]
  %v109 = vld [vmem:[%s1 + $0x258] sm:$0xff]
  %v110 = vld [vmem:[%s1 + $0x260] sm:$0xff]
  %v111 = vld [vmem:[%s1 + $0x268] sm:$0xff]
  %v112 = vld [vmem:[%s1 + $0x270] sm:$0xff]
  %v113 = vld [vmem:[%s1 + $0x278] sm:$0xff]
  %v114 = vld [vmem:[%s1 + $0x280] sm:$0xff]
  %v115 = vld [vmem:[%s1 + $0x288] sm:$0xff]
  %v116 = vld [vmem:[%s1 + $0x290] sm:$0xff]
  %v117 = vld [vmem:[%s1 + $0x298] sm:$0xff]
  %v118 = vld [vmem:[%s1 + $0x2a0] sm:$0xff]
  %v119 = vld [vmem:[%s1 + $0x2a8] sm:$0xff]
  %v120 = vld [vmem:[%s1 + $0x2b0] sm:$0xff]
  %v121 = vld [vmem:[%s1 + $0x2b8] sm:$0xff]
  %v122 = vld [vmem:[%s1 + $0x2c0] sm:$0xff]
  %v123 = vld [vmem:[%s1 + $0x2c8] sm:$0xff]
  %v124 = vld [vmem:[%s1 + $0x2d0] sm:$0xff]
  %v125 = vld [vmem:[%s1 + $0x2d8] sm:$0xff]
  %v126 = vld [vmem:[%s1 + $0x2e0] sm:$0xff]
  %v127 = vld [vmem:[%s1 + $0x2e8] sm:$0xff]
  %v128 = vld [vmem:[%s1 + $0x2f0] sm:$0xff]
  %v129 = vld [vmem:[%s1 + $0x2f8] sm:$0xff]
  %v130 = vld [vmem:[%s1 + $0x300] sm:$0xff]
  %v131 = vld [vmem:[%s1 + $0x308] sm:$0xff]
  %v132 = vld [vmem:[%s1 + $0x310] sm:$0xff]
  %v133 = vld [vmem:[%s1 + $0x318] sm:$0xff]
  %v134 = vld [vmem:[%s1 + $0x320] sm:$0xff]
  %v135 = vld [vmem:[%s1 + $0x328] sm:$0xff]
  %v136 = vld [vmem:[%s1 + $0x330] sm:$0xff]
  %v137 = vld [vmem:[%s1 + $0x338] sm:$0xff]
  %v138 = vld [vmem:[%s1 + $0x340] sm:$0xff]
  %v139 = vld [vmem:[%s1 + $0x348] sm:$0xff]
  %v140 = vld [vmem:[%s1 + $0x350] sm:$0xff]
  %v141 = vld [vmem:[%s1 + $0x358] sm:$0xff]
  %v142 = vld [vmem:[%s1 + $0x360] sm:$0xff]
  %v143 = vld [vmem:[%s1 + $0x368] sm:$0xff]
  %v144 = vld [vmem:[%s1 + $0x370] sm:$0xff]
  %v145 = vld [vmem:[%s1 + $0x378] sm:$0xff]
  %v146 = vld [vmem:[%s1 + $0x380] sm:$0xff]
  %v147 = vld [vmem:[%s1 + $0x388] sm:$0xff]
  %v148 = vld [vmem:[%s1 + $0x390] sm:$0xff]
  %v149 = vld [vmem:[%s1 + $0x398] sm:$0xff]
  %v150 = vld [vmem:[%s1 + $0x3a0] sm:$0xff]
  %v151 = vld [vmem:[%s1 + $0x3a8] sm:$0xff]
  %v152 = vld [vmem:[%s1 + $0x3b0] sm:$0xff]
  %v153 = vld [vmem:[%s1 + $0x3b8] sm:$0xff]
  %v154 = vld [vmem:[%s1 + $0x3c0] sm:$0xff]
  %v155 = vld [vmem:[%s1 + $0x3c8] sm:$0xff]
  %v156 = vld [vmem:[%s1 + $0x3d0] sm:$0xff]
  %v157 = vld [vmem:[%s1 + $0x3d8] sm:$0xff]
  %v158 = vld [vmem:[%s1 + $0x3e0] sm:$0xff]
  %v159 = vld [vmem:[%s1 + $0x3e8] sm:$0xff]
  %v160 = vld [vmem:[%s1 + $0x3f0] sm:$0xff]
  %v161 = vld [vmem:[%s1 + $0x3f8] sm:$0xff]
  %v162 = vld [vmem:[%s2] sm:$0x3]
  %v164 = vperm.slane %v162, 0
  %v165 = vperm.slane %v162, 1
  %169 = vst [vmem:[#allocation1] ss:$9 sm:$0xff] %v33
  %v170 = vld [vmem:[#allocation1] sm:$0xff]
  %v171 = vld [vmem:[#allocation1 + $0x9] sm:$0xff]
  %v172 = vld [vmem:[#allocation1 + $0x12] sm:$0xff]
  %v173 = vld [vmem:[#allocation1 + $0x1b] sm:$0xff]
  %v174 = vld [vmem:[#allocation1 + $0x24] sm:$0xff]
  %v175 = vld [vmem:[#allocation1 + $0x2d] sm:$0xff]
  %v176 = vld [vmem:[#allocation1 + $0x36] sm:$0xff]
  %v177 = vld [vmem:[#allocation1 + $0x3f] sm:$0xff]
  %v314 = vunpack.c.l.b16 %v34
  %v315 = vunpack.c.h.b16 %v34
  %v316 = vunpack.c.l.b16 %v35
  %v317 = vunpack.c.h.b16 %v35
  %v318 = vunpack.c.l.b16 %v36
  %v319 = vunpack.c.h.b16 %v36
  %v320 = vunpack.c.l.b16 %v37
  %v321 = vunpack.c.h.b16 %v37
  %v322 = vunpack.c.l.b16 %v38
  %v323 = vunpack.c.h.b16 %v38
  %v324 = vunpack.c.l.b16 %v39
  %v325 = vunpack.c.h.b16 %v39
  %v326 = vunpack.c.l.b16 %v40
  %v327 = vunpack.c.h.b16 %v40
  %v328 = vunpack.c.l.b16 %v41
  %v329 = vunpack.c.h.b16 %v41
  %v330 = vunpack.c.l.b16 %v42
  %v331 = vunpack.c.h.b16 %v42
  %v332 = vunpack.c.l.b16 %v43
  %v333 = vunpack.c.h.b16 %v43
  %v334 = vunpack.c.l.b16 %v44
  %v335 = vunpack.c.h.b16 %v44
  %v336 = vunpack.c.l.b16 %v45
  %v337 = vunpack.c.h.b16 %v45
  %v338 = vunpack.c.l.b16 %v46
  %v339 = vunpack.c.h.b16 %v46
  %v340 = vunpack.c.l.b16 %v47
  %v341 = vunpack.c.h.b16 %v47
  %v342 = vunpack.c.l.b16 %v48
  %v343 = vunpack.c.h.b16 %v48
  %v344 = vunpack.c.l.b16 %v49
  %v345 = vunpack.c.h.b16 %v49
  %v346 = vunpack.c.l.b16 %v50
  %v347 = vunpack.c.h.b16 %v50
  %v348 = vunpack.c.l.b16 %v51
  %v349 = vunpack.c.h.b16 %v51
  %v350 = vunpack.c.l.b16 %v52
  %v351 = vunpack.c.h.b16 %v52
  %v352 = vunpack.c.l.b16 %v53
  %v353 = vunpack.c.h.b16 %v53
  %v354 = vunpack.c.l.b16 %v54
  %v355 = vunpack.c.h.b16 %v54
  %v356 = vunpack.c.l.b16 %v55
  %v357 = vunpack.c.h.b16 %v55
  %v358 = vunpack.c.l.b16 %v56
  %v359 = vunpack.c.h.b16 %v56
  %v360 = vunpack.c.l.b16 %v57
  %v361 = vunpack.c.h.b16 %v57
  %v362 = vunpack.c.l.b16 %v58
  %v363 = vunpack.c.h.b16 %v58
  %v364 = vunpack.c.l.b16 %v59
  %v365 = vunpack.c.h.b16 %v59
  %v366 = vunpack.c.l.b16 %v60
  %v367 = vunpack.c.h.b16 %v60
  %v368 = vunpack.c.l.b16 %v61
  %v369 = vunpack.c.h.b16 %v61
  %v370 = vunpack.c.l.b16 %v62
  %v371 = vunpack.c.h.b16 %v62
  %v372 = vunpack.c.l.b16 %v63
  %v373 = vunpack.c.h.b16 %v63
  %v374 = vunpack.c.l.b16 %v64
  %v375 = vunpack.c.h.b16 %v64
  %v376 = vunpack.c.l.b16 %v65
  %v377 = vunpack.c.h.b16 %v65
  %v378 = vunpack.c.l.b16 %v66
  %v379 = vunpack.c.h.b16 %v66
  %v380 = vunpack.c.l.b16 %v67
  %v381 = vunpack.c.h.b16 %v67
  %v382 = vunpack.c.l.b16 %v68
  %v383 = vunpack.c.h.b16 %v68
  %v384 = vunpack.c.l.b16 %v69
  %v385 = vunpack.c.h.b16 %v69
  %v386 = vunpack.c.l.b16 %v70
  %v387 = vunpack.c.h.b16 %v70
  %v388 = vunpack.c.l.b16 %v71
  %v389 = vunpack.c.h.b16 %v71
  %v390 = vunpack.c.l.b16 %v72
  %v391 = vunpack.c.h.b16 %v72
  %v392 = vunpack.c.l.b16 %v73
  %v393 = vunpack.c.h.b16 %v73
  %v394 = vunpack.c.l.b16 %v74
  %v395 = vunpack.c.h.b16 %v74
  %v396 = vunpack.c.l.b16 %v75
  %v397 = vunpack.c.h.b16 %v75
  %v398 = vunpack.c.l.b16 %v76
  %v399 = vunpack.c.h.b16 %v76
  %v400 = vunpack.c.l.b16 %v77
  %v401 = vunpack.c.h.b16 %v77
  %v402 = vunpack.c.l.b16 %v78
  %v403 = vunpack.c.h.b16 %v78
  %v404 = vunpack.c.l.b16 %v79
  %v405 = vunpack.c.h.b16 %v79
  %v406 = vunpack.c.l.b16 %v80
  %v407 = vunpack.c.h.b16 %v80
  %v408 = vunpack.c.l.b16 %v81
  %v409 = vunpack.c.h.b16 %v81
  %v410 = vunpack.c.l.b16 %v82
  %v411 = vunpack.c.h.b16 %v82
  %v412 = vunpack.c.l.b16 %v83
  %v413 = vunpack.c.h.b16 %v83
  %v414 = vunpack.c.l.b16 %v84
  %v415 = vunpack.c.h.b16 %v84
  %v416 = vunpack.c.l.b16 %v85
  %v417 = vunpack.c.h.b16 %v85
  %v418 = vunpack.c.l.b16 %v86
  %v419 = vunpack.c.h.b16 %v86
  %v420 = vunpack.c.l.b16 %v87
  %v421 = vunpack.c.h.b16 %v87
  %v422 = vunpack.c.l.b16 %v88
  %v423 = vunpack.c.h.b16 %v88
  %v424 = vunpack.c.l.b16 %v89
  %v425 = vunpack.c.h.b16 %v89
  %v426 = vunpack.c.l.b16 %v90
  %v427 = vunpack.c.h.b16 %v90
  %v428 = vunpack.c.l.b16 %v91
  %v429 = vunpack.c.h.b16 %v91
  %v430 = vunpack.c.l.b16 %v92
  %v431 = vunpack.c.h.b16 %v92
  %v432 = vunpack.c.l.b16 %v93
  %v433 = vunpack.c.h.b16 %v93
  %v434 = vunpack.c.l.b16 %v94
  %v435 = vunpack.c.h.b16 %v94
  %v436 = vunpack.c.l.b16 %v95
  %v437 = vunpack.c.h.b16 %v95
  %v438 = vunpack.c.l.b16 %v96
  %v439 = vunpack.c.h.b16 %v96
  %v440 = vunpack.c.l.b16 %v97
  %v441 = vunpack.c.h.b16 %v97
  %v442 = vunpack.c.l.b16 %v98
  %v443 = vunpack.c.h.b16 %v98
  %v444 = vunpack.c.l.b16 %v99
  %v445 = vunpack.c.h.b16 %v99
  %v446 = vunpack.c.l.b16 %v100
  %v447 = vunpack.c.h.b16 %v100
  %v448 = vunpack.c.l.b16 %v101
  %v449 = vunpack.c.h.b16 %v101
  %v450 = vunpack.c.l.b16 %v102
  %v451 = vunpack.c.h.b16 %v102
  %v452 = vunpack.c.l.b16 %v103
  %v453 = vunpack.c.h.b16 %v103
  %v454 = vunpack.c.l.b16 %v104
  %v455 = vunpack.c.h.b16 %v104
  %v456 = vunpack.c.l.b16 %v105
  %v457 = vunpack.c.h.b16 %v105
  %v458 = vunpack.c.l.b16 %v106
  %v459 = vunpack.c.h.b16 %v106
  %v460 = vunpack.c.l.b16 %v107
  %v461 = vunpack.c.h.b16 %v107
  %v462 = vunpack.c.l.b16 %v108
  %v463 = vunpack.c.h.b16 %v108
  %v464 = vunpack.c.l.b16 %v109
  %v465 = vunpack.c.h.b16 %v109
  %v466 = vunpack.c.l.b16 %v110
  %v467 = vunpack.c.h.b16 %v110
  %v468 = vunpack.c.l.b16 %v111
  %v469 = vunpack.c.h.b16 %v111
  %v470 = vunpack.c.l.b16 %v112
  %v471 = vunpack.c.h.b16 %v112
  %v472 = vunpack.c.l.b16 %v113
  %v473 = vunpack.c.h.b16 %v113
  %v474 = vunpack.c.l.b16 %v114
  %v475 = vunpack.c.h.b16 %v114
  %v476 = vunpack.c.l.b16 %v115
  %v477 = vunpack.c.h.b16 %v115
  %v478 = vunpack.c.l.b16 %v116
  %v479 = vunpack.c.h.b16 %v116
  %v480 = vunpack.c.l.b16 %v117
  %v481 = vunpack.c.h.b16 %v117
  %v482 = vunpack.c.l.b16 %v118
  %v483 = vunpack.c.h.b16 %v118
  %v484 = vunpack.c.l.b16 %v119
  %v485 = vunpack.c.h.b16 %v119
  %v486 = vunpack.c.l.b16 %v120
  %v487 = vunpack.c.h.b16 %v120
  %v488 = vunpack.c.l.b16 %v121
  %v489 = vunpack.c.h.b16 %v121
  %v490 = vunpack.c.l.b16 %v122
  %v491 = vunpack.c.h.b16 %v122
  %v492 = vunpack.c.l.b16 %v123
  %v493 = vunpack.c.h.b16 %v123
  %v494 = vunpack.c.l.b16 %v124
  %v495 = vunpack.c.h.b16 %v124
  %v496 = vunpack.c.l.b16 %v125
  %v497 = vunpack.c.h.b16 %v125
  %v498 = vunpack.c.l.b16 %v126
  %v499 = vunpack.c.h.b16 %v126
  %v500 = vunpack.c.l.b16 %v127
  %v501 = vunpack.c.h.b16 %v127
  %v502 = vunpack.c.l.b16 %v128
  %v503 = vunpack.c.h.b16 %v128
  %v504 = vunpack.c.l.b16 %v129
  %v505 = vunpack.c.h.b16 %v129
  %v506 = vunpack.c.l.b16 %v130
  %v507 = vunpack.c.h.b16 %v130
  %v508 = vunpack.c.l.b16 %v131
  %v509 = vunpack.c.h.b16 %v131
  %v510 = vunpack.c.l.b16 %v132
  %v511 = vunpack.c.h.b16 %v132
  %v512 = vunpack.c.l.b16 %v133
  %v513 = vunpack.c.h.b16 %v133
  %v514 = vunpack.c.l.b16 %v134
  %v515 = vunpack.c.h.b16 %v134
  %v516 = vunpack.c.l.b16 %v135
  %v517 = vunpack.c.h.b16 %v135
  %v518 = vunpack.c.l.b16 %v136
  %v519 = vunpack.c.h.b16 %v136
  %v520 = vunpack.c.l.b16 %v137
  %v521 = vunpack.c.h.b16 %v137
  %v522 = vunpack.c.l.b16 %v138
  %v523 = vunpack.c.h.b16 %v138
  %v524 = vunpack.c.l.b16 %v139
  %v525 = vunpack.c.h.b16 %v139
  %v526 = vunpack.c.l.b16 %v140
  %v527 = vunpack.c.h.b16 %v140
  %v528 = vunpack.c.l.b16 %v141
  %v529 = vunpack.c.h.b16 %v141
  %v530 = vunpack.c.l.b16 %v142
  %v531 = vunpack.c.h.b16 %v142
  %v532 = vunpack.c.l.b16 %v143
  %v533 = vunpack.c.h.b16 %v143
  %v534 = vunpack.c.l.b16 %v144
  %v535 = vunpack.c.h.b16 %v144
  %v536 = vunpack.c.l.b16 %v145
  %v537 = vunpack.c.h.b16 %v145
  %v538 = vunpack.c.l.b16 %v146
  %v539 = vunpack.c.h.b16 %v146
  %v540 = vunpack.c.l.b16 %v147
  %v541 = vunpack.c.h.b16 %v147
  %v542 = vunpack.c.l.b16 %v148
  %v543 = vunpack.c.h.b16 %v148
  %v544 = vunpack.c.l.b16 %v149
  %v545 = vunpack.c.h.b16 %v149
  %v546 = vunpack.c.l.b16 %v150
  %v547 = vunpack.c.h.b16 %v150
  %v548 = vunpack.c.l.b16 %v151
  %v549 = vunpack.c.h.b16 %v151
  %v550 = vunpack.c.l.b16 %v152
  %v551 = vunpack.c.h.b16 %v152
  %v552 = vunpack.c.l.b16 %v153
  %v553 = vunpack.c.h.b16 %v153
  %v554 = vunpack.c.l.b16 %v154
  %v555 = vunpack.c.h.b16 %v154
  %v556 = vunpack.c.l.b16 %v155
  %v557 = vunpack.c.h.b16 %v155
  %v558 = vunpack.c.l.b16 %v156
  %v559 = vunpack.c.h.b16 %v156
  %v560 = vunpack.c.l.b16 %v157
  %v561 = vunpack.c.h.b16 %v157
  %v562 = vunpack.c.l.b16 %v158
  %v563 = vunpack.c.h.b16 %v158
  %v564 = vunpack.c.l.b16 %v159
  %v565 = vunpack.c.h.b16 %v159
  %v566 = vunpack.c.l.b16 %v160
  %v567 = vunpack.c.h.b16 %v160
  %v568 = vunpack.c.l.b16 %v161
  %v569 = vunpack.c.h.b16 %v161
  %v570 = vpack.c.b16 %v316, %v314
  %v571 = vpack.c.b16 %v317, %v315
  %v572 = vpack.c.b16 %v320, %v318
  %v573 = vpack.c.b16 %v321, %v319
  %v574 = vpack.c.b16 %v324, %v322
  %v575 = vpack.c.b16 %v325, %v323
  %v576 = vpack.c.b16 %v328, %v326
  %v577 = vpack.c.b16 %v329, %v327
  %v578 = vpack.c.b16 %v332, %v330
  %v579 = vpack.c.b16 %v333, %v331
  %v580 = vpack.c.b16 %v336, %v334
  %v581 = vpack.c.b16 %v337, %v335
  %v582 = vpack.c.b16 %v340, %v338
  %v583 = vpack.c.b16 %v341, %v339
  %v584 = vpack.c.b16 %v344, %v342
  %v585 = vpack.c.b16 %v345, %v343
  %v586 = vpack.c.b16 %v348, %v346
  %v587 = vpack.c.b16 %v349, %v347
  %v588 = vpack.c.b16 %v352, %v350
  %v589 = vpack.c.b16 %v353, %v351
  %v590 = vpack.c.b16 %v356, %v354
  %v591 = vpack.c.b16 %v357, %v355
  %v592 = vpack.c.b16 %v360, %v358
  %v593 = vpack.c.b16 %v361, %v359
  %v594 = vpack.c.b16 %v364, %v362
  %v595 = vpack.c.b16 %v365, %v363
  %v596 = vpack.c.b16 %v368, %v366
  %v597 = vpack.c.b16 %v369, %v367
  %v598 = vpack.c.b16 %v372, %v370
  %v599 = vpack.c.b16 %v373, %v371
  %v600 = vpack.c.b16 %v376, %v374
  %v601 = vpack.c.b16 %v377, %v375
  %v602 = vpack.c.b16 %v380, %v378
  %v603 = vpack.c.b16 %v381, %v379
  %v604 = vpack.c.b16 %v384, %v382
  %v605 = vpack.c.b16 %v385, %v383
  %v606 = vpack.c.b16 %v388, %v386
  %v607 = vpack.c.b16 %v389, %v387
  %v608 = vpack.c.b16 %v392, %v390
  %v609 = vpack.c.b16 %v393, %v391
  %v610 = vpack.c.b16 %v396, %v394
  %v611 = vpack.c.b16 %v397, %v395
  %v612 = vpack.c.b16 %v400, %v398
  %v613 = vpack.c.b16 %v401, %v399
  %v614 = vpack.c.b16 %v404, %v402
  %v615 = vpack.c.b16 %v405, %v403
  %v616 = vpack.c.b16 %v408, %v406
  %v617 = vpack.c.b16 %v409, %v407
  %v618 = vpack.c.b16 %v412, %v410
  %v619 = vpack.c.b16 %v413, %v411
  %v620 = vpack.c.b16 %v416, %v414
  %v621 = vpack.c.b16 %v417, %v415
  %v622 = vpack.c.b16 %v420, %v418
  %v623 = vpack.c.b16 %v421, %v419
  %v624 = vpack.c.b16 %v424, %v422
  %v625 = vpack.c.b16 %v425, %v423
  %v626 = vpack.c.b16 %v428, %v426
  %v627 = vpack.c.b16 %v429, %v427
  %v628 = vpack.c.b16 %v432, %v430
  %v629 = vpack.c.b16 %v433, %v431
  %v630 = vpack.c.b16 %v436, %v434
  %v631 = vpack.c.b16 %v437, %v435
  %v632 = vpack.c.b16 %v440, %v438
  %v633 = vpack.c.b16 %v441, %v439
  %v634 = vpack.c.b16 %v444, %v442
  %v635 = vpack.c.b16 %v445, %v443
  %v636 = vpack.c.b16 %v448, %v446
  %v637 = vpack.c.b16 %v449, %v447
  %v638 = vpack.c.b16 %v452, %v450
  %v639 = vpack.c.b16 %v453, %v451
  %v640 = vpack.c.b16 %v456, %v454
  %v641 = vpack.c.b16 %v457, %v455
  %v642 = vpack.c.b16 %v460, %v458
  %v643 = vpack.c.b16 %v461, %v459
  %v644 = vpack.c.b16 %v464, %v462
  %v645 = vpack.c.b16 %v465, %v463
  %v646 = vpack.c.b16 %v468, %v466
  %v647 = vpack.c.b16 %v469, %v467
  %v648 = vpack.c.b16 %v472, %v470
  %v649 = vpack.c.b16 %v473, %v471
  %v650 = vpack.c.b16 %v476, %v474
  %v651 = vpack.c.b16 %v477, %v475
  %v652 = vpack.c.b16 %v480, %v478
  %v653 = vpack.c.b16 %v481, %v479
  %v654 = vpack.c.b16 %v484, %v482
  %v655 = vpack.c.b16 %v485, %v483
  %v656 = vpack.c.b16 %v488, %v486
  %v657 = vpack.c.b16 %v489, %v487
  %v658 = vpack.c.b16 %v492, %v490
  %v659 = vpack.c.b16 %v493, %v491
  %v660 = vpack.c.b16 %v496, %v494
  %v661 = vpack.c.b16 %v497, %v495
  %v662 = vpack.c.b16 %v500, %v498
  %v663 = vpack.c.b16 %v501, %v499
  %v664 = vpack.c.b16 %v504, %v502
  %v665 = vpack.c.b16 %v505, %v503
  %v666 = vpack.c.b16 %v508, %v506
  %v667 = vpack.c.b16 %v509, %v507
  %v668 = vpack.c.b16 %v512, %v510
  %v669 = vpack.c.b16 %v513, %v511
  %v670 = vpack.c.b16 %v516, %v514
  %v671 = vpack.c.b16 %v517, %v515
  %v672 = vpack.c.b16 %v520, %v518
  %v673 = vpack.c.b16 %v521, %v519
  %v674 = vpack.c.b16 %v524, %v522
  %v675 = vpack.c.b16 %v525, %v523
  %v676 = vpack.c.b16 %v528, %v526
  %v677 = vpack.c.b16 %v529, %v527
  %v678 = vpack.c.b16 %v532, %v530
  %v679 = vpack.c.b16 %v533, %v531
  %v680 = vpack.c.b16 %v536, %v534
  %v681 = vpack.c.b16 %v537, %v535
  %v682 = vpack.c.b16 %v540, %v538
  %v683 = vpack.c.b16 %v541, %v539
  %v684 = vpack.c.b16 %v544, %v542
  %v685 = vpack.c.b16 %v545, %v543
  %v686 = vpack.c.b16 %v548, %v546
  %v687 = vpack.c.b16 %v549, %v547
  %v688 = vpack.c.b16 %v552, %v550
  %v689 = vpack.c.b16 %v553, %v551
  %v690 = vpack.c.b16 %v556, %v554
  %v691 = vpack.c.b16 %v557, %v555
  %v692 = vpack.c.b16 %v560, %v558
  %v693 = vpack.c.b16 %v561, %v559
  %v694 = vpack.c.b16 %v564, %v562
  %v695 = vpack.c.b16 %v565, %v563
  %v696 = vpack.c.b16 %v568, %v566
  %v697 = vpack.c.b16 %v569, %v567
  %826 = vmatpush.bf16.msra.mxu0 %v584
  %827 = vmatpush.bf16.msra.mxu0 %v582
  %828 = vmatpush.bf16.msra.mxu0 %v580
  %829 = vmatpush.bf16.msra.mxu0 %v578
  %830 = vmatpush.bf16.msra.mxu0 %v576
  %831 = vmatpush.bf16.msra.mxu0 %v574
  %832 = vmatpush.bf16.msra.mxu0 %v572
  %833 = vmatpush.bf16.msra.mxu0 %v570
  %834 = vmatmul.bf16.gmra.mxu0 %v170
  %v835 = vpop.f32.mrf.mxu0
  %v836 = vadd.f32 %v164, %v835
  %v837 = vpop.f32.mrf.mxu0
  %838 = vdwg.mxu0
  %839 = vmatpush.bf16.msra.mxu0 %v600
  %840 = vmatpush.bf16.msra.mxu0 %v598
  %841 = vmatpush.bf16.msra.mxu0 %v596
  %842 = vmatpush.bf16.msra.mxu0 %v594
  %843 = vmatpush.bf16.msra.mxu0 %v592
  %844 = vmatpush.bf16.msra.mxu0 %v590
  %845 = vmatpush.bf16.msra.mxu0 %v588
  %846 = vmatpush.bf16.msra.mxu0 %v586
  %847 = vmatmul.bf16.gmra.mxu0 %v171
  %v848 = vpop.f32.mrf.mxu0
  %v849 = vadd.f32 %v836, %v848
  %v850 = vpop.f32.mrf.mxu0
  %851 = vdwg.mxu0
  %852 = vmatpush.bf16.msra.mxu0 %v616
  %853 = vmatpush.bf16.msra.mxu0 %v614
  %854 = vmatpush.bf16.msra.mxu0 %v612
  %855 = vmatpush.bf16.msra.mxu0 %v610
  %856 = vmatpush.bf16.msra.mxu0 %v608
  %857 = vmatpush.bf16.msra.mxu0 %v606
  %858 = vmatpush.bf16.msra.mxu0 %v604
  %859 = vmatpush.bf16.msra.mxu0 %v602
  %860 = vmatmul.bf16.gmra.mxu0 %v172
  %v861 = vpop.f32.mrf.mxu0
  %v862 = vadd.f32 %v849, %v861
  %v863 = vpop.f32.mrf.mxu0
  %864 = vdwg.mxu0
  %865 = vmatpush.bf16.msra.mxu0 %v632
  %866 = vmatpush.bf16.msra.mxu0 %v630
  %867 = vmatpush.bf16.msra.mxu0 %v628
  %868 = vmatpush.bf16.msra.mxu0 %v626
  %869 = vmatpush.bf16.msra.mxu0 %v624
  %870 = vmatpush.bf16.msra.mxu0 %v622
  %871 = vmatpush.bf16.msra.mxu0 %v620
  %872 = vmatpush.bf16.msra.mxu0 %v618
  %873 = vmatmul.bf16.gmra.mxu0 %v173
  %v874 = vpop.f32.mrf.mxu0
  %v875 = vadd.f32 %v862, %v874
  %v876 = vpop.f32.mrf.mxu0
  %877 = vdwg.mxu0
  %878 = vmatpush.bf16.msra.mxu0 %v648
  %879 = vmatpush.bf16.msra.mxu0 %v646
  %880 = vmatpush.bf16.msra.mxu0 %v644
  %881 = vmatpush.bf16.msra.mxu0 %v642
  %882 = vmatpush.bf16.msra.mxu0 %v640
  %883 = vmatpush.bf16.msra.mxu0 %v638
  %884 = vmatpush.bf16.msra.mxu0 %v636
  %885 = vmatpush.bf16.msra.mxu0 %v634
  %886 = vmatmul.bf16.gmra.mxu0 %v174
  %v887 = vpop.f32.mrf.mxu0
  %v888 = vadd.f32 %v875, %v887
  %v889 = vpop.f32.mrf.mxu0
  %890 = vdwg.mxu0
  %891 = vmatpush.bf16.msra.mxu0 %v664
  %892 = vmatpush.bf16.msra.mxu0 %v662
  %893 = vmatpush.bf16.msra.mxu0 %v660
  %894 = vmatpush.bf16.msra.mxu0 %v658
  %895 = vmatpush.bf16.msra.mxu0 %v656
  %896 = vmatpush.bf16.msra.mxu0 %v654
  %897 = vmatpush.bf16.msra.mxu0 %v652
  %898 = vmatpush.bf16.msra.mxu0 %v650
  %899 = vmatmul.bf16.gmra.mxu0 %v175
  %v900 = vpop.f32.mrf.mxu0
  %v901 = vadd.f32 %v888, %v900
  %v902 = vpop.f32.mrf.mxu0
  %903 = vdwg.mxu0
  %904 = vmatpush.bf16.msra.mxu0 %v680
  %905 = vmatpush.bf16.msra.mxu0 %v678
  %906 = vmatpush.bf16.msra.mxu0 %v676
  %907 = vmatpush.bf16.msra.mxu0 %v674
  %908 = vmatpush.bf16.msra.mxu0 %v672
  %909 = vmatpush.bf16.msra.mxu0 %v670
  %910 = vmatpush.bf16.msra.mxu0 %v668
  %911 = vmatpush.bf16.msra.mxu0 %v666
  %912 = vmatmul.bf16.gmra.mxu0 %v176
  %v913 = vpop.f32.mrf.mxu0
  %v914 = vadd.f32 %v901, %v913
  %v915 = vpop.f32.mrf.mxu0
  %916 = vdwg.mxu0
  %917 = vmatpush.bf16.msra.mxu0 %v696
  %918 = vmatpush.bf16.msra.mxu0 %v694
  %919 = vmatpush.bf16.msra.mxu0 %v692
  %920 = vmatpush.bf16.msra.mxu0 %v690
  %921 = vmatpush.bf16.msra.mxu0 %v688
  %922 = vmatpush.bf16.msra.mxu0 %v686
  %923 = vmatpush.bf16.msra.mxu0 %v684
  %924 = vmatpush.bf16.msra.mxu0 %v682
  %925 = vmatmul.bf16.gmra.mxu0 %v177
  %v926 = vpop.f32.mrf.mxu0
  %v927 = vadd.f32 %v914, %v926
  %v928 = vpop.f32.mrf.mxu0
  %929 = vdwg.mxu0
  %930 = vmatpush.bf16.msra.mxu0 %v585
  %931 = vmatpush.bf16.msra.mxu0 %v583
  %932 = vmatpush.bf16.msra.mxu0 %v581
  %933 = vmatpush.bf16.msra.mxu0 %v579
  %934 = vmatpush.bf16.msra.mxu0 %v577
  %935 = vmatpush.bf16.msra.mxu0 %v575
  %936 = vmatpush.bf16.msra.mxu0 %v573
  %937 = vmatpush.bf16.msra.mxu0 %v571
  %938 = vmatmul.bf16.gmra.mxu0 %v170
  %v939 = vpop.f32.mrf.mxu0
  %v940 = vadd.f32 %v165, %v939
  %v941 = vpop.f32.mrf.mxu0
  %942 = vdwg.mxu0
  %943 = vmatpush.bf16.msra.mxu0 %v601
  %944 = vmatpush.bf16.msra.mxu0 %v599
  %945 = vmatpush.bf16.msra.mxu0 %v597
  %946 = vmatpush.bf16.msra.mxu0 %v595
  %947 = vmatpush.bf16.msra.mxu0 %v593
  %948 = vmatpush.bf16.msra.mxu0 %v591
  %949 = vmatpush.bf16.msra.mxu0 %v589
  %950 = vmatpush.bf16.msra.mxu0 %v587
  %951 = vmatmul.bf16.gmra.mxu0 %v171
  %v952 = vpop.f32.mrf.mxu0
  %v953 = vadd.f32 %v940, %v952
  %v954 = vpop.f32.mrf.mxu0
  %955 = vdwg.mxu0
  %956 = vmatpush.bf16.msra.mxu0 %v617
  %957 = vmatpush.bf16.msra.mxu0 %v615
  %958 = vmatpush.bf16.msra.mxu0 %v613
  %959 = vmatpush.bf16.msra.mxu0 %v611
  %960 = vmatpush.bf16.msra.mxu0 %v609
  %961 = vmatpush.bf16.msra.mxu0 %v607
  %962 = vmatpush.bf16.msra.mxu0 %v605
  %963 = vmatpush.bf16.msra.mxu0 %v603
  %964 = vmatmul.bf16.gmra.mxu0 %v172
  %v965 = vpop.f32.mrf.mxu0
  %v966 = vadd.f32 %v953, %v965
  %v967 = vpop.f32.mrf.mxu0
  %968 = vdwg.mxu0
  %969 = vmatpush.bf16.msra.mxu0 %v633
  %970 = vmatpush.bf16.msra.mxu0 %v631
  %971 = vmatpush.bf16.msra.mxu0 %v629
  %972 = vmatpush.bf16.msra.mxu0 %v627
  %973 = vmatpush.bf16.msra.mxu0 %v625
  %974 = vmatpush.bf16.msra.mxu0 %v623
  %975 = vmatpush.bf16.msra.mxu0 %v621
  %976 = vmatpush.bf16.msra.mxu0 %v619
  %977 = vmatmul.bf16.gmra.mxu0 %v173
  %v978 = vpop.f32.mrf.mxu0
  %v979 = vadd.f32 %v966, %v978
  %v980 = vpop.f32.mrf.mxu0
  %981 = vdwg.mxu0
  %982 = vmatpush.bf16.msra.mxu0 %v649
  %983 = vmatpush.bf16.msra.mxu0 %v647
  %984 = vmatpush.bf16.msra.mxu0 %v645
  %985 = vmatpush.bf16.msra.mxu0 %v643
  %986 = vmatpush.bf16.msra.mxu0 %v641
  %987 = vmatpush.bf16.msra.mxu0 %v639
  %988 = vmatpush.bf16.msra.mxu0 %v637
  %989 = vmatpush.bf16.msra.mxu0 %v635
  %990 = vmatmul.bf16.gmra.mxu0 %v174
  %v991 = vpop.f32.mrf.mxu0
  %v992 = vadd.f32 %v979, %v991
  %v993 = vpop.f32.mrf.mxu0
  %994 = vdwg.mxu0
  %995 = vmatpush.bf16.msra.mxu0 %v665
  %996 = vmatpush.bf16.msra.mxu0 %v663
  %997 = vmatpush.bf16.msra.mxu0 %v661
  %998 = vmatpush.bf16.msra.mxu0 %v659
  %999 = vmatpush.bf16.msra.mxu0 %v657
  %1000 = vmatpush.bf16.msra.mxu0 %v655
  %1001 = vmatpush.bf16.msra.mxu0 %v653
  %1002 = vmatpush.bf16.msra.mxu0 %v651
  %1003 = vmatmul.bf16.gmra.mxu0 %v175
  %v1004 = vpop.f32.mrf.mxu0
  %v1005 = vadd.f32 %v992, %v1004
  %v1006 = vpop.f32.mrf.mxu0
  %1007 = vdwg.mxu0
  %1008 = vmatpush.bf16.msra.mxu0 %v681
  %1009 = vmatpush.bf16.msra.mxu0 %v679
  %1010 = vmatpush.bf16.msra.mxu0 %v677
  %1011 = vmatpush.bf16.msra.mxu0 %v675
  %1012 = vmatpush.bf16.msra.mxu0 %v673
  %1013 = vmatpush.bf16.msra.mxu0 %v671
  %1014 = vmatpush.bf16.msra.mxu0 %v669
  %1015 = vmatpush.bf16.msra.mxu0 %v667
  %1016 = vmatmul.bf16.gmra.mxu0 %v176
  %v1017 = vpop.f32.mrf.mxu0
  %v1018 = vadd.f32 %v1005, %v1017
  %v1019 = vpop.f32.mrf.mxu0
  %1020 = vdwg.mxu0
  %1021 = vmatpush.bf16.msra.mxu0 %v697
  %1022 = vmatpush.bf16.msra.mxu0 %v695
  %1023 = vmatpush.bf16.msra.mxu0 %v693
  %1024 = vmatpush.bf16.msra.mxu0 %v691
  %1025 = vmatpush.bf16.msra.mxu0 %v689
  %1026 = vmatpush.bf16.msra.mxu0 %v687
  %1027 = vmatpush.bf16.msra.mxu0 %v685
  %1028 = vmatpush.bf16.msra.mxu0 %v683
  %1029 = vmatmul.bf16.gmra.mxu0 %v177
  %v1030 = vpop.f32.mrf.mxu0
  %v1031 = vadd.f32 %v1018, %v1030
  %v1032 = vpop.f32.mrf.mxu0
  %1033 = vdwg.mxu0
  %v1034 = vmax.f32 %v1031, 0.0
  %v1035 = vpack.c.bf16 %v1034, %v1034
  %v1036 = vld [vmem:[%s3] sm:$0xf]
  %v1037 = vld [vmem:[%s3 + $0x4] sm:$0xf]
  %v1038 = vld [vmem:[%s3 + $0x8] sm:$0xf]
  %v1039 = vld [vmem:[%s3 + $0xc] sm:$0xf]
  %v1040 = vld [vmem:[%s4] sm:$0x1]
  %v1042 = vperm.slane %v1040, 0
  %v1048 = vunpack.c.l.b16 %v1036
  %v1049 = vunpack.c.l.b16 %v1037
  %v1050 = vunpack.c.l.b16 %v1038
  %v1051 = vunpack.c.l.b16 %v1039
  %v1052 = vpack.c.b16 %v1049, %v1048
  %v1053 = vpack.c.b16 %v1051, %v1050
  %vm1056 = vcmask 261120
  %v1058 = vsel %vm1056, %v1035, 0
  %1060 = vmatpush.bf16.msra.mxu0 0
  %1061 = vmatpush.bf16.msra.mxu0 0
  %1062 = vmatpush.bf16.msra.mxu0 0
  %1063 = vmatpush.bf16.msra.mxu0 0
  %1064 = vmatpush.bf16.msra.mxu0 0
  %1065 = vmatpush.bf16.msra.mxu0 0
  %1066 = vmatpush.bf16.msra.mxu0 %v1053
  %1067 = vmatpush.bf16.msra.mxu0 %v1052
  %1068 = vmatmul.bf16.gmra.mxu0 %v1058
  %v1069 = vpop.f32.mrf.mxu0
  %v1070 = vadd.f32 %v1042, %v1069
  %v1071 = vpop.f32.mrf.mxu0
  %1072 = vdwg.mxu0
  %vm1073 = vcmask 58368
  %v1074 = vsel %vm1073, %v1070, -inf
  %1075 = vmax.xlane.f32.xlu0 %v1074
  %v1076 = vpop.xlane.xlu0 %1075
  %v1077 = vsub.f32 %v1070, %v1076
  %v1078 = vmul.f32 %v1077, 1.442695
  %v1079 = vpow.pop %v1078
  %v1080 = vsel %vm1073, %v1079, 0.0
  %1081 = vadd.xlane.f32.xlu0 %v1080
  %v1082 = vpop.xlane.xlu0 %1081
  %v1083 = vrcp.pop %v1082
  %v1084 = vmul.f32 %v1082, %v1083
  %v1085 = vsub.f32 1.0, %v1084
  %v1086 = vmul.f32 %v1083, %v1085
  %v1087 = vadd.f32 %v1083, %v1086
  %vm1088 = vweird.f32 %v1082
  %vm1089 = vweird.f32 %v1083
  %vm1090 = vmor %vm1088, %vm1089
  %v1091 = vsel %vm1090, %v1083, %v1087
  %v1092 = vand.u32 2147483647, %v1082
  %vm1093 = vcmp.eq.f32.partialorder %v1092, 8.507059e+37
  %v1094 = vand.u32 %v1082, 2147483648
  %v1095 = vor.u32 1.1754944e-38, %v1094
  %v1096 = vsel %vm1093, %v1095, %v1091
  %v1097 = vmul.f32 %v1079, %v1096
  %v1098 = vpack.c.bf16 %v927, %v927
  %v1099 = vld [vmem:[%s5] sm:$0xf]
  %v1100 = vld [vmem:[%s5 + $0x4] sm:$0xf]
  %v1101 = vld [vmem:[%s5 + $0x8] sm:$0xf]
  %v1102 = vld [vmem:[%s5 + $0xc] sm:$0xf]
  %v1103 = vld [vmem:[%s5 + $0x10] sm:$0xf]
  %v1104 = vld [vmem:[%s5 + $0x14] sm:$0xf]
  %v1105 = vld [vmem:[%s5 + $0x18] sm:$0xf]
  %v1106 = vld [vmem:[%s5 + $0x1c] sm:$0xf]
  %v1107 = vld [vmem:[%s5 + $0x20] sm:$0xf]
  %v1108 = vld [vmem:[%s5 + $0x24] sm:$0xf]
  %v1109 = vld [vmem:[%s5 + $0x28] sm:$0xf]
  %v1110 = vld [vmem:[%s5 + $0x2c] sm:$0xf]
  %v1111 = vld [vmem:[%s5 + $0x30] sm:$0xf]
  %v1112 = vld [vmem:[%s5 + $0x34] sm:$0xf]
  %v1113 = vld [vmem:[%s5 + $0x38] sm:$0xf]
  %v1114 = vld [vmem:[%s5 + $0x3c] sm:$0xf]
  %v1115 = vld [vmem:[%s6] sm:$0x1]
  %v1117 = vperm.slane %v1115, 0
  %v1135 = vunpack.c.l.b16 %v1099
  %v1136 = vunpack.c.l.b16 %v1100
  %v1137 = vunpack.c.l.b16 %v1101
  %v1138 = vunpack.c.l.b16 %v1102
  %v1139 = vunpack.c.l.b16 %v1103
  %v1140 = vunpack.c.l.b16 %v1104
  %v1141 = vunpack.c.l.b16 %v1105
  %v1142 = vunpack.c.l.b16 %v1106
  %v1143 = vunpack.c.l.b16 %v1107
  %v1144 = vunpack.c.l.b16 %v1108
  %v1145 = vunpack.c.l.b16 %v1109
  %v1146 = vunpack.c.l.b16 %v1110
  %v1147 = vunpack.c.l.b16 %v1111
  %v1148 = vunpack.c.l.b16 %v1112
  %v1149 = vunpack.c.l.b16 %v1113
  %v1150 = vunpack.c.l.b16 %v1114
  %v1151 = vpack.c.b16 %v1136, %v1135
  %v1152 = vpack.c.b16 %v1138, %v1137
  %v1153 = vpack.c.b16 %v1140, %v1139
  %v1154 = vpack.c.b16 %v1142, %v1141
  %v1155 = vpack.c.b16 %v1144, %v1143
  %v1156 = vpack.c.b16 %v1146, %v1145
  %v1157 = vpack.c.b16 %v1148, %v1147
  %v1158 = vpack.c.b16 %v1150, %v1149
  %1167 = vmatpush.bf16.msra.mxu0 %v1158
  %1168 = vmatpush.bf16.msra.mxu0 %v1157
  %1169 = vmatpush.bf16.msra.mxu0 %v1156
  %1170 = vmatpush.bf16.msra.mxu0 %v1155
  %1171 = vmatpush.bf16.msra.mxu0 %v1154
  %1172 = vmatpush.bf16.msra.mxu0 %v1153
  %1173 = vmatpush.bf16.msra.mxu0 %v1152
  %1174 = vmatpush.bf16.msra.mxu0 %v1151
  %1175 = vmatmul.bf16.gmra.mxu0 %v1098
  %v1176 = vpop.f32.mrf.mxu0
  %v1177 = vadd.f32 %v1117, %v1176
  %v1178 = vpop.f32.mrf.mxu0
  %1179 = vdwg.mxu0
  %v1180 = vmul.f32 %v1177, %v1177
  %vm1181 = vcmask 123904
  %v1182 = vsel %vm1181, %v1180, 0.0
  %1183 = vadd.xlane.f32.xlu0 %v1182
  %v1184 = vpop.xlane.xlu0 %1183
  %v1185 = vmax.f32 %v1184, 1e-24
  %v1186 = vrsqrt.pop %v1185
  %v1187 = vmul.f32 %v1186, %v1185
  %v1188 = vmul.f32 %v1187, %v1186
  %v1189 = vmul.f32 0.5, %v1188
  %v1190 = vsub.f32 1.5, %v1189
  %v1191 = vmul.f32 %v1186, %v1190
  %vm1192 = vweird.f32 %v1185
  %vm1193 = vweird.f32 %v1186
  %vm1194 = vmor %vm1192, %vm1193
  %v1195 = vsel %vm1194, %v1186, %v1191
  %v1196 = vmul.f32 %v1177, %v1195
  %v1197 = vpack.c.bf16 %v1196, %v1196
  %v1198 = vld [vmem:[%s7] sm:$0xf]
  %v1199 = vld [vmem:[%s7 + $0x4] sm:$0xf]
  %v1202 = vunpack.c.l.b16 %v1198
  %v1203 = vunpack.c.l.b16 %v1199
  %v1204 = vpack.c.b16 %v1203, %v1202
  %vm1206 = vcmask 130048
  %v1208 = vsel %vm1206, %v1197, 0
  %1210 = vmatpush.bf16.msra.mxu0 0
  %1211 = vmatpush.bf16.msra.mxu0 0
  %1212 = vmatpush.bf16.msra.mxu0 0
  %1213 = vmatpush.bf16.msra.mxu0 0
  %1214 = vmatpush.bf16.msra.mxu0 0
  %1215 = vmatpush.bf16.msra.mxu0 0
  %1216 = vmatpush.bf16.msra.mxu0 0
  %1217 = vmatpush.bf16.msra.mxu0 %v1204
  %1218 = vmatmul.bf16.gmra.mxu0 %v1208
  %v1219 = vpop.f32.mrf.mxu0
  %v1220 = vadd.f32 0.0, %v1219
  %v1221 = vpop.f32.mrf.mxu0
  %1222 = vdwg.mxu0
  %v1223 = vsub.f32 0.0, %v1220
  %v1224 = vmul.f32 %v1223, 1.442695
  %v1225 = vpow.pop %v1224
  %v1226 = vadd.f32 %v1225, 1.0
  %v1227 = vrcp.pop %v1226
  %v1228 = vpack.c.bf16 %v1097, %v1097
  %v1229 = vld [vmem:[%s8] sm:$0xf]
  %vm1230 = vcmask 64512
  %v1232 = vsel %vm1230, %v1228, 0
  %vm1234 = vcmask 1043456
  %v1236 = vsel %vm1234, %v1229, 0
  %1238 = vmatpush.bf16.msra.mxu0 0
  %1239 = vmatpush.bf16.msra.mxu0 0
  %1240 = vmatpush.bf16.msra.mxu0 0
  %1241 = vmatpush.bf16.msra.mxu0 0
  %1242 = vmatpush.bf16.msra.mxu0 0
  %1243 = vmatpush.bf16.msra.mxu0 0
  %1244 = vmatpush.bf16.msra.mxu0 0
  %1245 = vmatpush.bf16.msra.mxu0 %v1236
  %1246 = vmatmul.bf16.gmra.mxu0 %v1232
  %v1247 = vpop.f32.mrf.mxu0
  %v1248 = vadd.f32 0.0, %v1247
  %v1249 = vpop.f32.mrf.mxu0
  %1250 = vdwg.mxu0
  %1252 = vrot.lane.b32.xlu0 %v1248, 88
  %v1253 = vpop.permute.xlu0 %1252
  %v1255 = vmul.f32 %v1227, %v1253
  %v1256 = vsub.f32 1.0, %v1227
  %v1257 = vmul.f32 %v1256, %v1248
  %v1258 = vadd.f32 %v1255, %v1257
  %1260 = vrot.lane.b32.xlu0 %v1097, 40
  %v1261 = vpop.permute.xlu0 %1260
  %vm1263 = vcmask 326656
  %v1264 = vsel %vm1263, %v1258, %v1261
  %vm1265 = vcmask 386048
  %1266 = vst.msk [vmem:[%s9] sm:$0x3] %vm1265, %v1264
  // Predicated region
  $region38: #{conal_forward.1} parent=0 // pred_check
    _
  $region39: #{conal_forward.1} parent=0 // pred_check_branch
    %1268 = sbr.rel (0) target = $region41
  $region40: #{conal_forward.1} parent=0 // pred_region
    _
  $region41: #{conal_forward.1} parent=0 // pred_fallthru
    _
  // Predicated region
  $region42: #{conal_forward.1} parent=0 // pred_check
    _
  $region43: #{conal_forward.1} parent=0 // pred_check_branch
    %1270 = sbr.rel (0) target = $region45
  $region44: #{conal_forward.1} parent=0 // pred_region
    _
  $region45: #{conal_forward.1} parent=0 // pred_fallthru
    _

</llo_original>
